<compile_context>
chip_gen: v7x
topology: tpu7x:2x2x1
jax: 0.10.0
libtpu: 0.0.40
codegen_flags: <defaults>
</compile_context>

<pallas_src>
import math
import functools

import jax
import jax.numpy as jnp
from jax.experimental import pallas as pl
from jax.experimental.pallas import tpu as pltpu

D_K = 64
D_V = 64

# Optional: run exp() in bf16 (EUP relief on v6e/v7x, keep False on v5e which
# has no bf16 EUP).  Off by default; accuracy stays well inside 5e-2 when on.
_BF16_EXP = False


@functools.lru_cache(maxsize=None)
def _vmem_budgets():
    """(soft per-step working-set budget, scoped vmem_limit_bytes), per chip gen."""
    try:
        cap = int(pltpu.get_tpu_info().vmem_capacity_bytes)
    except Exception:
        cap = 128 * 1024 * 1024  # assume a 128 MiB part if query unavailable
    # v7x (64 MiB):  soft ~25.6 MiB, limit 48 MiB
    # v5e/v6e (128): soft ~51.2 MiB, limit 96 MiB
    soft = min(int(cap * 0.4), 64 * 1024 * 1024)
    limit = min(int(cap * 0.75), 100 * 1024 * 1024)
    return soft, limit


def _tile_vmem_bytes(g, S, TQ, dk, dv):
    """Rough per-grid-step VMEM footprint (depth-2 buffered I/O + f32 temporaries)."""
    ins = g * (TQ * dk * 2 + S * dk * 2 + S * dv * 2 + TQ * S * 1)  # q,k,v bf16 + mask i8
    outs = g * (TQ * S * 2 + TQ * dv * 4)                           # attn bf16, ctx f32
    tmps = 3 * g * TQ * S * 4                                       # scores / e / attn f32
    return 2 * (ins + outs) + tmps


def _pick_tiles(BH, S, dk, dv, soft_budget):
    """VMEM-aware (TQ, G): shrink TQ until g=1 fits the budget, then grow G."""
    candidates = [t for t in (512, 256, 128, 64, 32, 16, 8) if t <= S and S % t == 0]
    if not candidates:
        candidates = [S]
    TQ = candidates[-1]  # smallest (best effort if even g=1 exceeds the budget)
    for t in candidates:  # largest TQ whose g=1 footprint fits
        if _tile_vmem_bytes(1, S, t, dk, dv) <= soft_budget:
            TQ = t
            break
    G = 1
    for g in range(1, BH + 1):  # largest divisor of BH that still fits
        if BH % g == 0 and _tile_vmem_bytes(g, S, TQ, dk, dv) <= soft_budget:
            G = g
    return TQ, G


def _sdpa_kernel(q_ref, k_ref, v_ref, m_ref, ctx_ref, attn_ref):
    # blocks: q (G,TQ,dk) bf16 (pre-scaled by 1/sqrt(d_k) in the wrapper),
    #         k (G,S,dk) bf16, v (G,S,dv) bf16, m (G,TQ,S) int8
    q = q_ref[...]
    k = k_ref[...]
    v = v_ref[...]
    mask = m_ref[...]

    # scores = (Q / sqrt(d_k)) @ K^T -- bf16 MXU inputs, f32 accumulation.
    scores = jnp.einsum("gqd,gkd->gqk", q, k, preferred_element_type=jnp.float32)

    # masked_fill_(attn_mask, -1e9) (exact fill, so fully-masked rows -> uniform)
    scores = jnp.where(mask != 0, -1.0e9, scores)

    # numerically-stable softmax; reciprocal goes to the EUP slot.
    s_max = jnp.max(scores, axis=-1, keepdims=True)
    if _BF16_EXP:
        e = jnp.exp((scores - s_max).astype(jnp.bfloat16)).astype(jnp.float32)
    else:
        e = jnp.exp(scores - s_max)
    denom = jnp.sum(e, axis=-1, keepdims=True)
    attn = e * pl.reciprocal(denom, approx=True)

    # single bf16 cast, reused for both the attn output and the attn@V matmul.
    attn_bf16 = attn.astype(jnp.bfloat16)

    # context = attn @ V -- bf16 MXU inputs, f32 accumulation.
    ctx = jnp.einsum("gqk,gkd->gqd", attn_bf16, v,
                     preferred_element_type=jnp.float32)

    attn_ref[...] = attn_bf16.astype(attn_ref.dtype)
    ctx_ref[...] = ctx.astype(ctx_ref.dtype)


@jax.jit
def scaled_dot_product_attention(Q, K, V, attn_mask):
    """Q, K: [B,H,S,d_k]; V: [B,H,S,d_v]; attn_mask: [B,H,S,S] bool (True = masked).

    Returns (context [B,H,S,d_v] f32, attn [B,H,S,S] bf16).
    """
    B, H, S, dk = Q.shape
    dv = V.shape[-1]
    BH = B * H

    # Fold 1/sqrt(d_k) into the bf16 cast of Q (fuses into the cast that already
    # touches Q once); bf16 Q/K/V halves HBM traffic and doubles MXU throughput.
    inv_sqrt_dk = 1.0 / math.sqrt(dk)
    q = (Q * inv_sqrt_dk).reshape(BH, S, dk).astype(jnp.bfloat16)
    k = K.reshape(BH, S, dk).astype(jnp.bfloat16)
    v = V.reshape(BH, S, dv).astype(jnp.bfloat16)
    # int8 mask: the mask is the largest input at big S; int8 is 4x less HBM than int32.
    m = attn_mask.reshape(BH, S, S).astype(jnp.int8)

    soft_budget, vmem_limit = _vmem_budgets()
    TQ, G = _pick_tiles(BH, S, dk, dv, soft_budget)
    grid = (BH // G, pl.cdiv(S, TQ))

    ctx, attn = pl.pallas_call(
        _sdpa_kernel,
        out_shape=(
            jax.ShapeDtypeStruct((BH, S, dv), jnp.float32),
            jax.ShapeDtypeStruct((BH, S, S), jnp.bfloat16),  # bf16 attn writeback
        ),
        grid=grid,
        in_specs=[
            pl.BlockSpec((G, TQ, dk), lambda b, qi: (b, qi, 0)),  # Q: query-tiled
            pl.BlockSpec((G, S, dk), lambda b, qi: (b, 0, 0)),    # K: full, reused over qi
            pl.BlockSpec((G, S, dv), lambda b, qi: (b, 0, 0)),    # V: full, reused over qi
            pl.BlockSpec((G, TQ, S), lambda b, qi: (b, qi, 0)),   # mask: query-tiled
        ],
        out_specs=(
            pl.BlockSpec((G, TQ, dv), lambda b, qi: (b, qi, 0)),  # context
            pl.BlockSpec((G, TQ, S), lambda b, qi: (b, qi, 0)),   # attn
        ),
        compiler_params=pltpu.CompilerParams(
            dimension_semantics=("parallel", "parallel"),
            vmem_limit_bytes=vmem_limit,
        ),
    )(q, k, v, m)

    return ctx.reshape(B, H, S, dv), attn.reshape(B, H, S, S)


def _reference(Q, K, V, attn_mask):
    dk = Q.shape[-1]
    scores = jnp.einsum("bhqd,bhkd->bhqk", Q, K) / jnp.float32(math.sqrt(dk))
    scores = jnp.where(attn_mask, jnp.float32(-1.0e9), scores)
    attn = jax.nn.softmax(scores, axis=-1)
    ctx = jnp.einsum("bhqk,bhkd->bhqd", attn, V)
    return ctx, attn


if __name__ == "__main__":
    B, H, S = 2, 2, 8

    key = jax.random.PRNGKey(0)
    kq, kk, kv, km = jax.random.split(key, 4)

    Q = jax.random.normal(kq, (B, H, S, D_K), dtype=jnp.float32)
    K = jax.random.normal(kk, (B, H, S, D_K), dtype=jnp.float32)
    V = jax.random.normal(kv, (B, H, S, D_V), dtype=jnp.float32)
    # boolean mask, True == masked (as in torch masked_fill_)
    attn_mask = jax.random.uniform(km, (B, H, S, S)) < 0.2

    ctx, attn = scaled_dot_product_attention(Q, K, V, attn_mask)
    jax.block_until_ready((ctx, attn))

    ctx_ref, attn_ref = _reference(Q, K, V, attn_mask)
    # bf16 MXU inputs + bf16 attn writeback => compare against the f32 reference
    # with loosened tolerance.
    assert jnp.allclose(attn.astype(jnp.float32), attn_ref, atol=5e-2, rtol=5e-2)
    assert jnp.allclose(ctx, ctx_ref, atol=5e-2, rtol=5e-2)
    # softmax rows still normalize (bf16 storage + approx reciprocal error is tiny)
    assert jnp.allclose(jnp.sum(attn.astype(jnp.float32), axis=-1), 1.0, atol=1e-2)

    print("KERNEL_OK")
</pallas_src>

<mosaic_0001>
module attributes {stable_mosaic.version = 11 : i64} {
  func.func @_sdpa_kernel(%arg0: i32, %arg1: i32, %arg2: memref<4x8x64xbf16, #tpu.memory_space<vmem>>, %arg3: memref<4x8x64xbf16, #tpu.memory_space<vmem>>, %arg4: memref<4x8x64xbf16, #tpu.memory_space<vmem>>, %arg5: memref<4x8x8xi8, #tpu.memory_space<vmem>>, %arg6: memref<4x8x64xf32, #tpu.memory_space<vmem>>, %arg7: memref<4x8x8xbf16, #tpu.memory_space<vmem>>) attributes {dimension_semantics = [#tpu.dimension_semantics<parallel>, #tpu.dimension_semantics<parallel>], iteration_bounds = array<i64: 1, 1>, scalar_prefetch = 0 : i64, scratch_operands = 0 : i64, tpu.core_type = #tpu.core_type<tc>, window_params = [{transform_indices = @transform_0, window_bounds = array<i64: 4, 8, 64>}, {transform_indices = @transform_1, window_bounds = array<i64: 4, 8, 64>}, {transform_indices = @transform_2, window_bounds = array<i64: 4, 8, 64>}, {transform_indices = @transform_3, window_bounds = array<i64: 4, 8, 8>}, {transform_indices = @transform_4, window_bounds = array<i64: 4, 8, 64>}, {transform_indices = @transform_5, window_bounds = array<i64: 4, 8, 8>}]} {
    %c0 = arith.constant 0 : index
    %c0_0 = arith.constant 0 : index
    %c0_1 = arith.constant 0 : index
    %0 = vector.load %arg2[%c0, %c0_0, %c0_1] : memref<4x8x64xbf16, #tpu.memory_space<vmem>>, vector<4x8x64xbf16>
    %c0_2 = arith.constant 0 : index
    %c0_3 = arith.constant 0 : index
    %c0_4 = arith.constant 0 : index
    %1 = vector.load %arg3[%c0_2, %c0_3, %c0_4] : memref<4x8x64xbf16, #tpu.memory_space<vmem>>, vector<4x8x64xbf16>
    %c0_5 = arith.constant 0 : index
    %c0_6 = arith.constant 0 : index
    %c0_7 = arith.constant 0 : index
    %2 = vector.load %arg4[%c0_5, %c0_6, %c0_7] : memref<4x8x64xbf16, #tpu.memory_space<vmem>>, vector<4x8x64xbf16>
    %c0_8 = arith.constant 0 : index
    %c0_9 = arith.constant 0 : index
    %c0_10 = arith.constant 0 : index
    %3 = vector.load %arg5[%c0_8, %c0_9, %c0_10] : memref<4x8x8xi8, #tpu.memory_space<vmem>>, vector<4x8x8xi8>
    "tpu.trace_start"() <{level = 10 : i32, message = "gqd,gkd->gqk"}> : () -> ()
    %cst = arith.constant dense<0.000000e+00> : vector<4x8x8xf32>
    %4 = tpu.matmul %0, %1, %cst {dimension_numbers = #tpu.dot_dimension_numbers<[2], [2], [1], [1], [0, 0, 0, 1, 1, 1], [0], [0]>} : vector<4x8x64xbf16>, vector<4x8x64xbf16>, vector<4x8x8xf32> -> vector<4x8x8xf32>
    %c0_i8 = arith.constant 0 : i8
    "tpu.trace_stop"() : () -> ()
    %5 = vector.broadcast %c0_i8 : i8 to vector<4x8x8xi8>
    %6 = arith.cmpi ne, %3, %5 : vector<4x8x8xi8>
    %cst_11 = arith.constant -1.000000e+09 : f32
    %7 = vector.broadcast %cst_11 : f32 to vector<4x8x8xf32>
    %8 = arith.select %6, %7, %4 : vector<4x8x8xi1>, vector<4x8x8xf32>
    %cst_12 = arith.constant dense<0xFF800000> : vector<4x8xf32>
    %9 = vector.multi_reduction <maximumf>, %8, %cst_12 [2] : vector<4x8x8xf32> to vector<4x8xf32>
    %10 = vector.shape_cast %9 : vector<4x8xf32> to vector<4x8x1xf32>
    %11 = vector.broadcast %10 : vector<4x8x1xf32> to vector<4x8x8xf32>
    %12 = arith.subf %8, %11 : vector<4x8x8xf32>
    %13 = math.exp %12 : vector<4x8x8xf32>
    %cst_13 = arith.constant dense<0.000000e+00> : vector<4x8xf32>
    %14 = vector.multi_reduction <add>, %13, %cst_13 [2] : vector<4x8x8xf32> to vector<4x8xf32>
    %15 = vector.shape_cast %14 : vector<4x8xf32> to vector<4x8x1xf32>
    %16 = tpu.reciprocal %15 {approx = true} : vector<4x8x1xf32> -> vector<4x8x1xf32>
    %17 = vector.broadcast %16 : vector<4x8x1xf32> to vector<4x8x8xf32>
    %18 = arith.mulf %13, %17 : vector<4x8x8xf32>
    %19 = arith.truncf %18 : vector<4x8x8xf32> to vector<4x8x8xbf16>
    "tpu.trace_start"() <{level = 10 : i32, message = "gqk,gkd->gqd"}> : () -> ()
    %cst_14 = arith.constant dense<0.000000e+00> : vector<4x8x64xf32>
    %20 = tpu.matmul %19, %2, %cst_14 {dimension_numbers = #tpu.dot_dimension_numbers<[2], [1], [1], [2], [0, 0, 0, 1, 1, 2], [0], [0]>} : vector<4x8x8xbf16>, vector<4x8x64xbf16>, vector<4x8x64xf32> -> vector<4x8x64xf32>
    "tpu.trace_stop"() : () -> ()
    %c0_15 = arith.constant 0 : index
    %c0_16 = arith.constant 0 : index
    %c0_17 = arith.constant 0 : index
    %21 = vector.load %arg7[%c0_15, %c0_16, %c0_17] : memref<4x8x8xbf16, #tpu.memory_space<vmem>>, vector<4x8x8xbf16>
    tpu.vector_store %arg7[%c0_15, %c0_16, %c0_17], %19 {strides = array<i32>} : memref<4x8x8xbf16, #tpu.memory_space<vmem>>, vector<4x8x8xbf16>,
    %c0_18 = arith.constant 0 : index
    %c0_19 = arith.constant 0 : index
    %c0_20 = arith.constant 0 : index
    %22 = vector.load %arg6[%c0_18, %c0_19, %c0_20] : memref<4x8x64xf32, #tpu.memory_space<vmem>>, vector<4x8x64xf32>
    tpu.vector_store %arg6[%c0_18, %c0_19, %c0_20], %20 {strides = array<i32>} : memref<4x8x64xf32, #tpu.memory_space<vmem>>, vector<4x8x64xf32>,
    return
  }
  func.func @transform_0(%arg0: i32, %arg1: i32) -> (i32, i32, i32) {
    %c0_i32 = arith.constant 0 : i32
    %c0_i32_0 = arith.constant 0 : i32
    return %arg0, %arg1, %c0_i32 : i32, i32, i32
  }
  func.func @transform_1(%arg0: i32, %arg1: i32) -> (i32, i32, i32) {
    %c0_i32 = arith.constant 0 : i32
    %c0_i32_0 = arith.constant 0 : i32
    %c0_i32_1 = arith.constant 0 : i32
    return %arg0, %c0_i32, %c0_i32_0 : i32, i32, i32
  }
  func.func @transform_2(%arg0: i32, %arg1: i32) -> (i32, i32, i32) {
    %c0_i32 = arith.constant 0 : i32
    %c0_i32_0 = arith.constant 0 : i32
    %c0_i32_1 = arith.constant 0 : i32
    return %arg0, %c0_i32, %c0_i32_0 : i32, i32, i32
  }
  func.func @transform_3(%arg0: i32, %arg1: i32) -> (i32, i32, i32) {
    %c0_i32 = arith.constant 0 : i32
    %c0_i32_0 = arith.constant 0 : i32
    return %arg0, %arg1, %c0_i32 : i32, i32, i32
  }
  func.func @transform_4(%arg0: i32, %arg1: i32) -> (i32, i32, i32) {
    %c0_i32 = arith.constant 0 : i32
    %c0_i32_0 = arith.constant 0 : i32
    return %arg0, %arg1, %c0_i32 : i32, i32, i32
  }
  func.func @transform_5(%arg0: i32, %arg1: i32) -> (i32, i32, i32) {
    %c0_i32 = arith.constant 0 : i32
    %c0_i32_0 = arith.constant 0 : i32
    return %arg0, %arg1, %c0_i32 : i32, i32, i32
  }
}

</mosaic_0001>

<llo_original>
// kernel: scaled_dot_product_attention.1
$region0: #{scaled_dot_product_attention.1}
  #allocation0 [shape = 'u32[]', space=smem, size = 0x4, offset = 0x4, fixed_abs, tag = 'smem constant byte address 0x4 - core index']
  #allocation1 [shape = 'u32[144,128]{1,0:T(1,128)}', space=vmem, size = 0x12000, scoped, tag = 'internal scratch']
  %s0 = inlined_call_operand.hbm [shape: bf16[4,8,64], index: 0, kind: input, shape index: {}]
  %s1 = inlined_call_operand.hbm [shape: bf16[4,8,64], index: 1, kind: input, shape index: {}]
  %s2 = inlined_call_operand.hbm [shape: bf16[4,8,64], index: 2, kind: input, shape index: {}]
  %s3 = inlined_call_operand.hbm [shape: s8[4,8,8], index: 3, kind: input, shape index: {}]
  %s4 = inlined_call_operand.hbm [shape: f32[4,8,64], index: 4, kind: output, shape index: {0}]
  %s5 = inlined_call_operand.hbm [shape: bf16[4,8,8], index: 5, kind: output, shape index: {1}]
  %6 = xla_tuple %s4, %s5
  %s7 = sld [smem:[#allocation0]]
  $region50: #{scaled_dot_product_attention.1} parent=0
    _
  %s9 = ssub.s32 1, %s7
  %s10 = scalar_select 0, %s9, %s7
  $region1: #{scaled_dot_product_attention.1} parent=0
    #allocation2 [shape = 'u8[8192]{0}', space=vmem, size = 0x2000, scoped, tag = 'input window, operand 0, single buffered']
    #allocation3 [shape = 's32[1]{0}', space=sflag, size = 0x4, scoped, tag = 'scoped memory for scaled_dot_product_attention.1']
    #allocation4 [shape = 's32[1]{0}', space=sflag, size = 0x4, scoped, tag = 'scoped memory for scaled_dot_product_attention.1']
    #allocation5 [shape = 'u8[8192]{0}', space=vmem, size = 0x2000, scoped, tag = 'input window, operand 1, single buffered']
    #allocation6 [shape = 's32[1]{0}', space=sflag, size = 0x4, scoped, tag = 'scoped memory for scaled_dot_product_attention.1']
    #allocation7 [shape = 'u8[8192]{0}', space=vmem, size = 0x2000, scoped, tag = 'input window, operand 2, single buffered']
    #allocation8 [shape = 'u8[4096]{0}', space=vmem, size = 0x1000, scoped, tag = 'input window, operand 3, single buffered']
    #allocation9 [shape = 's32[1]{0}', space=sflag, size = 0x4, scoped, tag = 'scoped memory for scaled_dot_product_attention.1']
    #allocation10 [shape = 'u8[16384]{0}', space=vmem, size = 0x4000, scoped, tag = 'output window, operand 0, single buffered']
    #allocation11 [shape = 'u8[8192]{0}', space=vmem, size = 0x2000, scoped, tag = 'output window, operand 1, single buffered']
    #allocation12 [shape = 's32[1]{0}', space=sflag, size = 0x4, scoped, tag = 'scoped memory for scaled_dot_product_attention.1']
    %11 = vsyncpa [#allocation3], 0
    %12 = vsyncpa [#allocation6], 0
    %13 = vsyncpa [#allocation9], 0
    %14 = vsyncpa [#allocation4], 0
    %15 = vsyncpa [#allocation12], 0
    // Predicated region
    $region2: #{scaled_dot_product_attention.1} parent=1 // pred_check
      _
    $region3: #{scaled_dot_product_attention.1} parent=1 // pred_check_branch
      %17 = sbr.rel (0) target = $region5
    $region4: #{scaled_dot_product_attention.1} parent=1 // pred_region
      %s19 = ssub.s32 256, 256
      %20 = vsyncadd [#allocation3], %s19
      %s21 = sshll.u32 [#allocation2], 4
      %s22 = int_to_ptr.vmem [resolvable:$true] %s21
      %27 = dma.hbm_to_vmem [thread:$0]  %s0, 256, %s22, [#allocation3], 64, 64, 4
    $region5: #{scaled_dot_product_attention.1} parent=1 // pred_fallthru
      _
    // Predicated region
    $region6: #{scaled_dot_product_attention.1} parent=1 // pred_check
      _
    $region7: #{scaled_dot_product_attention.1} parent=1 // pred_check_branch
      %29 = sbr.rel (0) target = $region9
    $region8: #{scaled_dot_product_attention.1} parent=1 // pred_region
      %s31 = ssub.s32 256, 256
      %32 = vsyncadd [#allocation6], %s31
      %s33 = sshll.u32 [#allocation5], 4
      %s34 = int_to_ptr.vmem [resolvable:$true] %s33
      %39 = dma.hbm_to_vmem [thread:$0]  %s1, 256, %s34, [#allocation6], 64, 64, 4
    $region9: #{scaled_dot_product_attention.1} parent=1 // pred_fallthru
      _
    // Predicated region
    $region10: #{scaled_dot_product_attention.1} parent=1 // pred_check
      _
    $region11: #{scaled_dot_product_attention.1} parent=1 // pred_check_branch
      %41 = sbr.rel (0) target = $region13
    $region12: #{scaled_dot_product_attention.1} parent=1 // pred_region
      %s43 = ssub.s32 256, 256
      %44 = vsyncadd [#allocation6], %s43
      %s45 = sshll.u32 [#allocation7], 4
      %s46 = int_to_ptr.vmem [resolvable:$true] %s45
      %51 = dma.hbm_to_vmem [thread:$0]  %s2, 256, %s46, [#allocation6], 64, 64, 4
    $region13: #{scaled_dot_product_attention.1} parent=1 // pred_fallthru
      _
    // Predicated region
    $region14: #{scaled_dot_product_attention.1} parent=1 // pred_check
      _
    $region15: #{scaled_dot_product_attention.1} parent=1 // pred_check_branch
      %53 = sbr.rel (0) target = $region17
    $region16: #{scaled_dot_product_attention.1} parent=1 // pred_region
      %s55 = ssub.s32 128, 128
      %56 = vsyncadd [#allocation9], %s55
      %s57 = sshll.u32 [#allocation8], 4
      %s58 = int_to_ptr.vmem [resolvable:$true] %s57
      %63 = dma.hbm_to_vmem [thread:$0]  %s3, 128, %s58, [#allocation9], 32, 32, 2
    $region17: #{scaled_dot_product_attention.1} parent=1 // pred_fallthru
      _
    // Predicated region
    $region18: #{scaled_dot_product_attention.1} parent=1 // pred_check
      _
    $region19: #{scaled_dot_product_attention.1} parent=1 // pred_check_branch
      %65 = sbr.rel (0) target = $region21
    $region20: #{scaled_dot_product_attention.1} parent=1 // pred_region
      %66 = dma.done [#allocation3], 256
    $region21: #{scaled_dot_product_attention.1} parent=1 // pred_fallthru
      _
    // Predicated region
    $region22: #{scaled_dot_product_attention.1} parent=1 // pred_check
      _
    $region23: #{scaled_dot_product_attention.1} parent=1 // pred_check_branch
      %68 = sbr.rel (0) target = $region25
    $region24: #{scaled_dot_product_attention.1} parent=1 // pred_region
      %69 = dma.done [#allocation6], 256
    $region25: #{scaled_dot_product_attention.1} parent=1 // pred_fallthru
      _
    // Predicated region
    $region26: #{scaled_dot_product_attention.1} parent=1 // pred_check
      _
    $region27: #{scaled_dot_product_attention.1} parent=1 // pred_check_branch
      %71 = sbr.rel (0) target = $region29
    $region28: #{scaled_dot_product_attention.1} parent=1 // pred_region
      %72 = dma.done [#allocation6], 256
    $region29: #{scaled_dot_product_attention.1} parent=1 // pred_fallthru
      _
    // Predicated region
    $region30: #{scaled_dot_product_attention.1} parent=1 // pred_check
      _
    $region31: #{scaled_dot_product_attention.1} parent=1 // pred_check_branch
      %74 = sbr.rel (0) target = $region33
    $region32: #{scaled_dot_product_attention.1} parent=1 // pred_region
      %75 = dma.done [#allocation9], 128
    $region33: #{scaled_dot_product_attention.1} parent=1 // pred_fallthru
      _
    %v79 = vld [vmem:[#allocation2] sm:$0xf]
    %v80 = vld [vmem:[#allocation2 + $0x4] sm:$0xf]
    %v81 = vld [vmem:[#allocation2 + $0x8] sm:$0xf]
    %v82 = vld [vmem:[#allocation2 + $0xc] sm:$0xf]
    %v83 = vld [vmem:[#allocation5] sm:$0xf]
    %v84 = vld [vmem:[#allocation5 + $0x4] sm:$0xf]
    %v85 = vld [vmem:[#allocation5 + $0x8] sm:$0xf]
    %v86 = vld [vmem:[#allocation5 + $0xc] sm:$0xf]
    %v87 = vld [vmem:[#allocation7] sm:$0xf]
    %v88 = vld [vmem:[#allocation7 + $0x4] sm:$0xf]
    %v89 = vld [vmem:[#allocation7 + $0x8] sm:$0xf]
    %v90 = vld [vmem:[#allocation7 + $0xc] sm:$0xf]
    %v91 = vld [vmem:[#allocation8] sm:$0x3]
    %v92 = vld [vmem:[#allocation8 + $0x2] sm:$0x3]
    %v93 = vld [vmem:[#allocation8 + $0x4] sm:$0x3]
    %v94 = vld [vmem:[#allocation8 + $0x6] sm:$0x3]
    %vm95 = vcmask 523264
    %v97 = vsel %vm95, %v79, 0
    %v100 = vsel %vm95, %v83, 0
    %102 = vmatprep.subr.bf16.mxu0 0
    %103 = vmatpush1.bf16.xpose.msra.mxu0 %v100
    %104 = vmatprep.subr.bf16.mxu0 0
    %105 = vmatpush1.bf16.xpose.msra.mxu0 0
    %106 = vmatprep.subr.bf16.mxu0 0
    %107 = vmatpush1.bf16.xpose.msra.mxu0 0
    %108 = vmatprep.subr.bf16.mxu0 0
    %109 = vmatpush1.bf16.xpose.msra.mxu0 0
    %110 = vmatprep.subr.bf16.mxu0 0
    %111 = vmatpush1.bf16.xpose.msra.mxu0 0
    %112 = vmatprep.subr.bf16.mxu0 0
    %113 = vmatpush1.bf16.xpose.msra.mxu0 0
    %114 = vmatprep.subr.bf16.mxu0 0
    %115 = vmatpush1.bf16.xpose.msra.mxu0 0
    %116 = vmatprep.subr.bf16.mxu0 0
    %117 = vmatpush1.bf16.xpose.msra.mxu0 0
    %118 = vmatprep.subr.bf16.mxu0 0
    %119 = vmatpush1.bf16.xpose.msra.mxu0 0
    %120 = vmatprep.subr.bf16.mxu0 0
    %121 = vmatpush1.bf16.xpose.msra.mxu0 0
    %122 = vmatprep.subr.bf16.mxu0 0
    %123 = vmatpush1.bf16.xpose.msra.mxu0 0
    %124 = vmatprep.subr.bf16.mxu0 0
    %125 = vmatpush1.bf16.xpose.msra.mxu0 0
    %126 = vmatprep.subr.bf16.mxu0 0
    %127 = vmatpush1.bf16.xpose.msra.mxu0 0
    %128 = vmatprep.subr.bf16.mxu0 0
    %129 = vmatpush1.bf16.xpose.msra.mxu0 0
    %130 = vmatprep.subr.bf16.mxu0 0
    %131 = vmatpush1.bf16.xpose.msra.mxu0 0
    %132 = vmatprep.subr.bf16.mxu0 0
    %133 = vmatpush1.bf16.xpose.msra.mxu0 0
    %134 = vmatprep.mubr.bf16.mxu0 0
    %135 = vmatmul.mubr.bf16.gmra.mrb[0].mxu0 %v97
    %v136 = vpop.f32.mrb[0].mxu0
    %v137 = vadd.f32 0.0, %v136
    %v138 = vpop.f32.mrb[0].mxu0
    %v139 = vpop.f32.mrb[0].mxu0
    %v140 = vpop.f32.mrb[0].mxu0
    %141 = vdwg.mxu0
    %v143 = vsel %vm95, %v80, 0
    %v146 = vsel %vm95, %v84, 0
    %148 = vmatprep.subr.bf16.mxu0 0
    %149 = vmatpush1.bf16.xpose.msra.mxu0 %v146
    %150 = vmatprep.subr.bf16.mxu0 0
    %151 = vmatpush1.bf16.xpose.msra.mxu0 0
    %152 = vmatprep.subr.bf16.mxu0 0
    %153 = vmatpush1.bf16.xpose.msra.mxu0 0
    %154 = vmatprep.subr.bf16.mxu0 0
    %155 = vmatpush1.bf16.xpose.msra.mxu0 0
    %156 = vmatprep.subr.bf16.mxu0 0
    %157 = vmatpush1.bf16.xpose.msra.mxu0 0
    %158 = vmatprep.subr.bf16.mxu0 0
    %159 = vmatpush1.bf16.xpose.msra.mxu0 0
    %160 = vmatprep.subr.bf16.mxu0 0
    %161 = vmatpush1.bf16.xpose.msra.mxu0 0
    %162 = vmatprep.subr.bf16.mxu0 0
    %163 = vmatpush1.bf16.xpose.msra.mxu0 0
    %164 = vmatprep.subr.bf16.mxu0 0
    %165 = vmatpush1.bf16.xpose.msra.mxu0 0
    %166 = vmatprep.subr.bf16.mxu0 0
    %167 = vmatpush1.bf16.xpose.msra.mxu0 0
    %168 = vmatprep.subr.bf16.mxu0 0
    %169 = vmatpush1.bf16.xpose.msra.mxu0 0
    %170 = vmatprep.subr.bf16.mxu0 0
    %171 = vmatpush1.bf16.xpose.msra.mxu0 0
    %172 = vmatprep.subr.bf16.mxu0 0
    %173 = vmatpush1.bf16.xpose.msra.mxu0 0
    %174 = vmatprep.subr.bf16.mxu0 0
    %175 = vmatpush1.bf16.xpose.msra.mxu0 0
    %176 = vmatprep.subr.bf16.mxu0 0
    %177 = vmatpush1.bf16.xpose.msra.mxu0 0
    %178 = vmatprep.subr.bf16.mxu0 0
    %179 = vmatpush1.bf16.xpose.msra.mxu0 0
    %180 = vmatprep.mubr.bf16.mxu0 0
    %181 = vmatmul.mubr.bf16.gmra.mrb[0].mxu0 %v143
    %v182 = vpop.f32.mrb[0].mxu0
    %v183 = vadd.f32 0.0, %v182
    %v184 = vpop.f32.mrb[0].mxu0
    %v185 = vpop.f32.mrb[0].mxu0
    %v186 = vpop.f32.mrb[0].mxu0
    %187 = vdwg.mxu0
    %v189 = vsel %vm95, %v81, 0
    %v192 = vsel %vm95, %v85, 0
    %194 = vmatprep.subr.bf16.mxu0 0
    %195 = vmatpush1.bf16.xpose.msra.mxu0 %v192
    %196 = vmatprep.subr.bf16.mxu0 0
    %197 = vmatpush1.bf16.xpose.msra.mxu0 0
    %198 = vmatprep.subr.bf16.mxu0 0
    %199 = vmatpush1.bf16.xpose.msra.mxu0 0
    %200 = vmatprep.subr.bf16.mxu0 0
    %201 = vmatpush1.bf16.xpose.msra.mxu0 0
    %202 = vmatprep.subr.bf16.mxu0 0
    %203 = vmatpush1.bf16.xpose.msra.mxu0 0
    %204 = vmatprep.subr.bf16.mxu0 0
    %205 = vmatpush1.bf16.xpose.msra.mxu0 0
    %206 = vmatprep.subr.bf16.mxu0 0
    %207 = vmatpush1.bf16.xpose.msra.mxu0 0
    %208 = vmatprep.subr.bf16.mxu0 0
    %209 = vmatpush1.bf16.xpose.msra.mxu0 0
    %210 = vmatprep.subr.bf16.mxu0 0
    %211 = vmatpush1.bf16.xpose.msra.mxu0 0
    %212 = vmatprep.subr.bf16.mxu0 0
    %213 = vmatpush1.bf16.xpose.msra.mxu0 0
    %214 = vmatprep.subr.bf16.mxu0 0
    %215 = vmatpush1.bf16.xpose.msra.mxu0 0
    %216 = vmatprep.subr.bf16.mxu0 0
    %217 = vmatpush1.bf16.xpose.msra.mxu0 0
    %218 = vmatprep.subr.bf16.mxu0 0
    %219 = vmatpush1.bf16.xpose.msra.mxu0 0
    %220 = vmatprep.subr.bf16.mxu0 0
    %221 = vmatpush1.bf16.xpose.msra.mxu0 0
    %222 = vmatprep.subr.bf16.mxu0 0
    %223 = vmatpush1.bf16.xpose.msra.mxu0 0
    %224 = vmatprep.subr.bf16.mxu0 0
    %225 = vmatpush1.bf16.xpose.msra.mxu0 0
    %226 = vmatprep.mubr.bf16.mxu0 0
    %227 = vmatmul.mubr.bf16.gmra.mrb[0].mxu0 %v189
    %v228 = vpop.f32.mrb[0].mxu0
    %v229 = vadd.f32 0.0, %v228
    %v230 = vpop.f32.mrb[0].mxu0
    %v231 = vpop.f32.mrb[0].mxu0
    %v232 = vpop.f32.mrb[0].mxu0
    %233 = vdwg.mxu0
    %v235 = vsel %vm95, %v82, 0
    %v238 = vsel %vm95, %v86, 0
    %240 = vmatprep.subr.bf16.mxu0 0
    %241 = vmatpush1.bf16.xpose.msra.mxu0 %v238
    %242 = vmatprep.subr.bf16.mxu0 0
    %243 = vmatpush1.bf16.xpose.msra.mxu0 0
    %244 = vmatprep.subr.bf16.mxu0 0
    %245 = vmatpush1.bf16.xpose.msra.mxu0 0
    %246 = vmatprep.subr.bf16.mxu0 0
    %247 = vmatpush1.bf16.xpose.msra.mxu0 0
    %248 = vmatprep.subr.bf16.mxu0 0
    %249 = vmatpush1.bf16.xpose.msra.mxu0 0
    %250 = vmatprep.subr.bf16.mxu0 0
    %251 = vmatpush1.bf16.xpose.msra.mxu0 0
    %252 = vmatprep.subr.bf16.mxu0 0
    %253 = vmatpush1.bf16.xpose.msra.mxu0 0
    %254 = vmatprep.subr.bf16.mxu0 0
    %255 = vmatpush1.bf16.xpose.msra.mxu0 0
    %256 = vmatprep.subr.bf16.mxu0 0
    %257 = vmatpush1.bf16.xpose.msra.mxu0 0
    %258 = vmatprep.subr.bf16.mxu0 0
    %259 = vmatpush1.bf16.xpose.msra.mxu0 0
    %260 = vmatprep.subr.bf16.mxu0 0
    %261 = vmatpush1.bf16.xpose.msra.mxu0 0
    %262 = vmatprep.subr.bf16.mxu0 0
    %263 = vmatpush1.bf16.xpose.msra.mxu0 0
    %264 = vmatprep.subr.bf16.mxu0 0
    %265 = vmatpush1.bf16.xpose.msra.mxu0 0
    %266 = vmatprep.subr.bf16.mxu0 0
    %267 = vmatpush1.bf16.xpose.msra.mxu0 0
    %268 = vmatprep.subr.bf16.mxu0 0
    %269 = vmatpush1.bf16.xpose.msra.mxu0 0
    %270 = vmatprep.subr.bf16.mxu0 0
    %271 = vmatpush1.bf16.xpose.msra.mxu0 0
    %272 = vmatprep.mubr.bf16.mxu0 0
    %273 = vmatmul.mubr.bf16.gmra.mrb[0].mxu0 %v235
    %v274 = vpop.f32.mrb[0].mxu0
    %v275 = vadd.f32 0.0, %v274
    %v276 = vpop.f32.mrb[0].mxu0
    %v277 = vpop.f32.mrb[0].mxu0
    %v278 = vpop.f32.mrb[0].mxu0
    %279 = vdwg.mxu0
    %vm280 = vnez %v91
    %vm281 = vnez %v92
    %vm282 = vnez %v93
    %vm283 = vnez %v94
    %v284 = vsel %vm280, 16843009, 0
    %v285 = vsel %vm281, 16843009, 0
    %v286 = vsel %vm282, 16843009, 0
    %v287 = vsel %vm283, 16843009, 0
    %v288 = vunpack.c.0.s8 %v284
    %v289 = vunpack.c.0.s8 %v285
    %v290 = vunpack.c.0.s8 %v286
    %v291 = vunpack.c.0.s8 %v287
    %vm292 = vcmp.ne.s32.totalorder %v288, 0
    %vm293 = vcmp.ne.s32.totalorder %v289, 0
    %vm294 = vcmp.ne.s32.totalorder %v290, 0
    %vm295 = vcmp.ne.s32.totalorder %v291, 0
    %v296 = vsel %vm292, -1e+09, %v137
    %v297 = vsel %vm293, -1e+09, %v183
    %v298 = vsel %vm294, -1e+09, %v229
    %v299 = vsel %vm295, -1e+09, %v275
    %vm300 = vcmask 64512
    %v301 = vsel %vm300, %v296, -inf
    %302 = vmax.xlane.f32.xlu0 %v301
    %v303 = vpop.xlane.xlu0 %302
    %v304 = vsel %vm300, %v297, -inf
    %305 = vmax.xlane.f32.xlu0 %v304
    %v306 = vpop.xlane.xlu0 %305
    %v307 = vsel %vm300, %v298, -inf
    %308 = vmax.xlane.f32.xlu0 %v307
    %v309 = vpop.xlane.xlu0 %308
    %v310 = vsel %vm300, %v299, -inf
    %311 = vmax.xlane.f32.xlu0 %v310
    %v312 = vpop.xlane.xlu0 %311
    %v313 = vsub.f32 %v296, %v303
    %v314 = vsub.f32 %v297, %v306
    %v315 = vsub.f32 %v298, %v309
    %v316 = vsub.f32 %v299, %v312
    %v317 = vmul.f32 %v313, 1.442695
    %v318 = vpow.pop %v317
    %v319 = vmul.f32 %v314, 1.442695
    %v320 = vpow.pop %v319
    %v321 = vmul.f32 %v315, 1.442695
    %v322 = vpow.pop %v321
    %v323 = vmul.f32 %v316, 1.442695
    %v324 = vpow.pop %v323
    %v325 = vsel %vm300, %v318, 0.0
    %326 = vadd.xlane.f32.xlu0 %v325
    %v327 = vpop.xlane.xlu0 %326
    %v328 = vsel %vm300, %v320, 0.0
    %329 = vadd.xlane.f32.xlu0 %v328
    %v330 = vpop.xlane.xlu0 %329
    %v331 = vsel %vm300, %v322, 0.0
    %332 = vadd.xlane.f32.xlu0 %v331
    %v333 = vpop.xlane.xlu0 %332
    %v334 = vsel %vm300, %v324, 0.0
    %335 = vadd.xlane.f32.xlu0 %v334
    %v336 = vpop.xlane.xlu0 %335
    %v337 = vrcp.pop %v327
    %v338 = vrcp.pop %v330
    %v339 = vrcp.pop %v333
    %v340 = vrcp.pop %v336
    %v341 = vmul.f32 %v318, %v337
    %v342 = vmul.f32 %v320, %v338
    %v343 = vmul.f32 %v322, %v339
    %v344 = vmul.f32 %v324, %v340
    %v345 = vpack.c.bf16 %v341, %v341
    %v346 = vpack.c.bf16 %v342, %v342
    %v347 = vpack.c.bf16 %v343, %v343
    %v348 = vpack.c.bf16 %v344, %v344
    %v350 = vsel %vm300, %v345, 0
    %vm352 = vcmask 1043456
    %v354 = vsel %vm352, %v87, 0
    %356 = vmatprep.subr.bf16.mxu0 0
    %357 = vmatpush1.bf16.msra.mxu0 %v354
    %358 = vmatprep.subr.bf16.mxu0 0
    %359 = vmatpush1.bf16.msra.mxu0 0
    %360 = vmatprep.subr.bf16.mxu0 0
    %361 = vmatpush1.bf16.msra.mxu0 0
    %362 = vmatprep.subr.bf16.mxu0 0
    %363 = vmatpush1.bf16.msra.mxu0 0
    %364 = vmatprep.subr.bf16.mxu0 0
    %365 = vmatpush1.bf16.msra.mxu0 0
    %366 = vmatprep.subr.bf16.mxu0 0
    %367 = vmatpush1.bf16.msra.mxu0 0
    %368 = vmatprep.subr.bf16.mxu0 0
    %369 = vmatpush1.bf16.msra.mxu0 0
    %370 = vmatprep.subr.bf16.mxu0 0
    %371 = vmatpush1.bf16.msra.mxu0 0
    %372 = vmatprep.subr.bf16.mxu0 0
    %373 = vmatpush1.bf16.msra.mxu0 0
    %374 = vmatprep.subr.bf16.mxu0 0
    %375 = vmatpush1.bf16.msra.mxu0 0
    %376 = vmatprep.subr.bf16.mxu0 0
    %377 = vmatpush1.bf16.msra.mxu0 0
    %378 = vmatprep.subr.bf16.mxu0 0
    %379 = vmatpush1.bf16.msra.mxu0 0
    %380 = vmatprep.subr.bf16.mxu0 0
    %381 = vmatpush1.bf16.msra.mxu0 0
    %382 = vmatprep.subr.bf16.mxu0 0
    %383 = vmatpush1.bf16.msra.mxu0 0
    %384 = vmatprep.subr.bf16.mxu0 0
    %385 = vmatpush1.bf16.msra.mxu0 0
    %386 = vmatprep.subr.bf16.mxu0 0
    %387 = vmatpush1.bf16.msra.mxu0 0
    %388 = vmatprep.mubr.bf16.mxu0 0
    %389 = vmatmul.mubr.bf16.gmra.mrb[0].mxu0 %v350
    %v390 = vpop.f32.mrb[0].mxu0
    %v391 = vadd.f32 0.0, %v390
    %v392 = vpop.f32.mrb[0].mxu0
    %v393 = vpop.f32.mrb[0].mxu0
    %v394 = vpop.f32.mrb[0].mxu0
    %395 = vdwg.mxu0
    %v397 = vsel %vm300, %v346, 0
    %v400 = vsel %vm352, %v88, 0
    %402 = vmatprep.subr.bf16.mxu0 0
    %403 = vmatpush1.bf16.msra.mxu0 %v400
    %404 = vmatprep.subr.bf16.mxu0 0
    %405 = vmatpush1.bf16.msra.mxu0 0
    %406 = vmatprep.subr.bf16.mxu0 0
    %407 = vmatpush1.bf16.msra.mxu0 0
    %408 = vmatprep.subr.bf16.mxu0 0
    %409 = vmatpush1.bf16.msra.mxu0 0
    %410 = vmatprep.subr.bf16.mxu0 0
    %411 = vmatpush1.bf16.msra.mxu0 0
    %412 = vmatprep.subr.bf16.mxu0 0
    %413 = vmatpush1.bf16.msra.mxu0 0
    %414 = vmatprep.subr.bf16.mxu0 0
    %415 = vmatpush1.bf16.msra.mxu0 0
    %416 = vmatprep.subr.bf16.mxu0 0
    %417 = vmatpush1.bf16.msra.mxu0 0
    %418 = vmatprep.subr.bf16.mxu0 0
    %419 = vmatpush1.bf16.msra.mxu0 0
    %420 = vmatprep.subr.bf16.mxu0 0
    %421 = vmatpush1.bf16.msra.mxu0 0
    %422 = vmatprep.subr.bf16.mxu0 0
    %423 = vmatpush1.bf16.msra.mxu0 0
    %424 = vmatprep.subr.bf16.mxu0 0
    %425 = vmatpush1.bf16.msra.mxu0 0
    %426 = vmatprep.subr.bf16.mxu0 0
    %427 = vmatpush1.bf16.msra.mxu0 0
    %428 = vmatprep.subr.bf16.mxu0 0
    %429 = vmatpush1.bf16.msra.mxu0 0
    %430 = vmatprep.subr.bf16.mxu0 0
    %431 = vmatpush1.bf16.msra.mxu0 0
    %432 = vmatprep.subr.bf16.mxu0 0
    %433 = vmatpush1.bf16.msra.mxu0 0
    %434 = vmatprep.mubr.bf16.mxu0 0
    %435 = vmatmul.mubr.bf16.gmra.mrb[0].mxu0 %v397
    %v436 = vpop.f32.mrb[0].mxu0
    %v437 = vadd.f32 0.0, %v436
    %v438 = vpop.f32.mrb[0].mxu0
    %v439 = vpop.f32.mrb[0].mxu0
    %v440 = vpop.f32.mrb[0].mxu0
    %441 = vdwg.mxu0
    %v443 = vsel %vm300, %v347, 0
    %v446 = vsel %vm352, %v89, 0
    %448 = vmatprep.subr.bf16.mxu0 0
    %449 = vmatpush1.bf16.msra.mxu0 %v446
    %450 = vmatprep.subr.bf16.mxu0 0
    %451 = vmatpush1.bf16.msra.mxu0 0
    %452 = vmatprep.subr.bf16.mxu0 0
    %453 = vmatpush1.bf16.msra.mxu0 0
    %454 = vmatprep.subr.bf16.mxu0 0
    %455 = vmatpush1.bf16.msra.mxu0 0
    %456 = vmatprep.subr.bf16.mxu0 0
    %457 = vmatpush1.bf16.msra.mxu0 0
    %458 = vmatprep.subr.bf16.mxu0 0
    %459 = vmatpush1.bf16.msra.mxu0 0
    %460 = vmatprep.subr.bf16.mxu0 0
    %461 = vmatpush1.bf16.msra.mxu0 0
    %462 = vmatprep.subr.bf16.mxu0 0
    %463 = vmatpush1.bf16.msra.mxu0 0
    %464 = vmatprep.subr.bf16.mxu0 0
    %465 = vmatpush1.bf16.msra.mxu0 0
    %466 = vmatprep.subr.bf16.mxu0 0
    %467 = vmatpush1.bf16.msra.mxu0 0
    %468 = vmatprep.subr.bf16.mxu0 0
    %469 = vmatpush1.bf16.msra.mxu0 0
    %470 = vmatprep.subr.bf16.mxu0 0
    %471 = vmatpush1.bf16.msra.mxu0 0
    %472 = vmatprep.subr.bf16.mxu0 0
    %473 = vmatpush1.bf16.msra.mxu0 0
    %474 = vmatprep.subr.bf16.mxu0 0
    %475 = vmatpush1.bf16.msra.mxu0 0
    %476 = vmatprep.subr.bf16.mxu0 0
    %477 = vmatpush1.bf16.msra.mxu0 0
    %478 = vmatprep.subr.bf16.mxu0 0
    %479 = vmatpush1.bf16.msra.mxu0 0
    %480 = vmatprep.mubr.bf16.mxu0 0
    %481 = vmatmul.mubr.bf16.gmra.mrb[0].mxu0 %v443
    %v482 = vpop.f32.mrb[0].mxu0
    %v483 = vadd.f32 0.0, %v482
    %v484 = vpop.f32.mrb[0].mxu0
    %v485 = vpop.f32.mrb[0].mxu0
    %v486 = vpop.f32.mrb[0].mxu0
    %487 = vdwg.mxu0
    %v489 = vsel %vm300, %v348, 0
    %v492 = vsel %vm352, %v90, 0
    %494 = vmatprep.subr.bf16.mxu0 0
    %495 = vmatpush1.bf16.msra.mxu0 %v492
    %496 = vmatprep.subr.bf16.mxu0 0
    %497 = vmatpush1.bf16.msra.mxu0 0
    %498 = vmatprep.subr.bf16.mxu0 0
    %499 = vmatpush1.bf16.msra.mxu0 0
    %500 = vmatprep.subr.bf16.mxu0 0
    %501 = vmatpush1.bf16.msra.mxu0 0
    %502 = vmatprep.subr.bf16.mxu0 0
    %503 = vmatpush1.bf16.msra.mxu0 0
    %504 = vmatprep.subr.bf16.mxu0 0
    %505 = vmatpush1.bf16.msra.mxu0 0
    %506 = vmatprep.subr.bf16.mxu0 0
    %507 = vmatpush1.bf16.msra.mxu0 0
    %508 = vmatprep.subr.bf16.mxu0 0
    %509 = vmatpush1.bf16.msra.mxu0 0
    %510 = vmatprep.subr.bf16.mxu0 0
    %511 = vmatpush1.bf16.msra.mxu0 0
    %512 = vmatprep.subr.bf16.mxu0 0
    %513 = vmatpush1.bf16.msra.mxu0 0
    %514 = vmatprep.subr.bf16.mxu0 0
    %515 = vmatpush1.bf16.msra.mxu0 0
    %516 = vmatprep.subr.bf16.mxu0 0
    %517 = vmatpush1.bf16.msra.mxu0 0
    %518 = vmatprep.subr.bf16.mxu0 0
    %519 = vmatpush1.bf16.msra.mxu0 0
    %520 = vmatprep.subr.bf16.mxu0 0
    %521 = vmatpush1.bf16.msra.mxu0 0
    %522 = vmatprep.subr.bf16.mxu0 0
    %523 = vmatpush1.bf16.msra.mxu0 0
    %524 = vmatprep.subr.bf16.mxu0 0
    %525 = vmatpush1.bf16.msra.mxu0 0
    %526 = vmatprep.mubr.bf16.mxu0 0
    %527 = vmatmul.mubr.bf16.gmra.mrb[0].mxu0 %v489
    %v528 = vpop.f32.mrb[0].mxu0
    %v529 = vadd.f32 0.0, %v528
    %v530 = vpop.f32.mrb[0].mxu0
    %v531 = vpop.f32.mrb[0].mxu0
    %v532 = vpop.f32.mrb[0].mxu0
    %533 = vdwg.mxu0
    %vm534 = vcmask 60416
    %535 = vst.msk [vmem:[#allocation11] sm:$0xf] %vm534, %v345
    %536 = vst.msk [vmem:[#allocation11 + $0x4] sm:$0xf] %vm534, %v346
    %537 = vst.msk [vmem:[#allocation11 + $0x8] sm:$0xf] %vm534, %v347
    %538 = vst.msk [vmem:[#allocation11 + $0xc] sm:$0xf] %vm534, %v348
    %539 = vst.msk [vmem:[#allocation10] sm:$0xff] %vm95, %v391
    %540 = vst.msk [vmem:[#allocation10 + $0x8] sm:$0xff] %vm95, %v437
    %541 = vst.msk [vmem:[#allocation10 + $0x10] sm:$0xff] %vm95, %v483
    %542 = vst.msk [vmem:[#allocation10 + $0x18] sm:$0xff] %vm95, %v529
    // Predicated region
    $region34: #{scaled_dot_product_attention.1} parent=1 // pred_check
      _
    $region35: #{scaled_dot_product_attention.1} parent=1 // pred_check_branch
      %544 = sbr.rel (0) target = $region37
    $region36: #{scaled_dot_product_attention.1} parent=1 // pred_region
      %s546 = ssub.s32 512, 512
      %547 = vsyncadd [#allocation4], %s546
      %s548 = sshll.u32 [#allocation10], 4
      %s549 = int_to_ptr.vmem [resolvable:$true] %s548
      %554 = dma.vmem_to_hbm [thread:$0]  %s549, 512, %s4, [#allocation4], 128, 128, 8
    $region37: #{scaled_dot_product_attention.1} parent=1 // pred_fallthru
      _
    // Predicated region
    $region38: #{scaled_dot_product_attention.1} parent=1 // pred_check
      _
    $region39: #{scaled_dot_product_attention.1} parent=1 // pred_check_branch
      %556 = sbr.rel (0) target = $region41
    $region40: #{scaled_dot_product_attention.1} parent=1 // pred_region
      %s558 = ssub.s32 256, 256
      %559 = vsyncadd [#allocation12], %s558
      %s560 = sshll.u32 [#allocation11], 4
      %s561 = int_to_ptr.vmem [resolvable:$true] %s560
      %566 = dma.vmem_to_hbm [thread:$0]  %s561, 256, %s5, [#allocation12], 64, 64, 4
    $region41: #{scaled_dot_product_attention.1} parent=1 // pred_fallthru
      _
    // Predicated region
    $region42: #{scaled_dot_product_attention.1} parent=1 // pred_check
      _
    $region43: #{scaled_dot_product_attention.1} parent=1 // pred_check_branch
      %568 = sbr.rel (0) target = $region45
    $region44: #{scaled_dot_product_attention.1} parent=1 // pred_region
      %569 = dma.done [#allocation4], 512
    $region45: #{scaled_dot_product_attention.1} parent=1 // pred_fallthru
      _
    // Predicated region
    $region46: #{scaled_dot_product_attention.1} parent=1 // pred_check
      _
    $region47: #{scaled_dot_product_attention.1} parent=1 // pred_check_branch
      %571 = sbr.rel (0) target = $region49
    $region48: #{scaled_dot_product_attention.1} parent=1 // pred_region
      %572 = dma.done [#allocation12], 256
    $region49: #{scaled_dot_product_attention.1} parent=1 // pred_fallthru
      _
    %573 = vsyncpa [#allocation3], 1
    %574 = vsyncpa [#allocation6], 1
    %575 = vsyncpa [#allocation9], 1
    %576 = vsyncpa [#allocation4], 1
    %577 = vsyncpa [#allocation12], 1

</llo_original>
